<compile_context>
chip_gen: v5e
topology: v5e:2x2
jax: 0.10.0
libtpu: 0.0.40
codegen_flags: <defaults>
</compile_context>

<pallas_src>
import functools

import jax
import jax.numpy as jnp
from jax.experimental import pallas as pl
from jax.experimental.pallas import tpu as pltpu

BN_EPS = 1e-5
LEAKY_SLOPE = 0.2
_VMEM_LIMIT = 32 * 1024 * 1024          # safe scoped-VMEM on v5e/v6e/v7x
_VMEM_TILE_BUDGET = 12 * 1024 * 1024    # budget for the tiles themselves
_MAX_TILE_L = 32768                     # review: 16k-32k lanes per tile


def _round_up(x, m):
    return ((x + m - 1) // m) * m


def _round_down(x, m):
    return (x // m) * m


def _conv_tile(x, w_ref, k_eff, tile_l):
    """y[o, l] = sum_j W_j @ x[:, l + j] for one (C_eff, tile_l + halo) tile.

    Slice offsets j are Python ints (static), so no dynamic lane slicing.
    """
    y = jnp.dot(w_ref[0], x[:, 0:tile_l], preferred_element_type=jnp.float32)
    for j in range(1, k_eff):
        y = y + jnp.dot(w_ref[j], x[:, j:j + tile_l],
                        preferred_element_type=jnp.float32)
    return y


def _stats_kernel(x_ref, w_ref, sum_ref, sq_ref, *, k_eff, tile_l):
    """Accumulate per-channel sum / sum-of-squares of the conv output."""
    @pl.when(pl.program_id(1) == 0)
    def _():
        sum_ref[...] = jnp.zeros_like(sum_ref)
        sq_ref[...] = jnp.zeros_like(sq_ref)

    y = _conv_tile(x_ref[0], w_ref, k_eff, tile_l)        # (C_out, tile_l) f32
    sum_ref[0] += jnp.sum(y, axis=-1, keepdims=True)
    sq_ref[0] += jnp.sum(y * y, axis=-1, keepdims=True)


def _norm_kernel(x_ref, w_ref, s_ref, t_ref, o_ref, *, k_eff, tile_l):
    """Recompute conv tile, apply folded BN (y*s + t) + LeakyReLU, store NCL."""
    y = _conv_tile(x_ref[0, 0], w_ref, k_eff, tile_l)     # (C_out, tile_l) f32
    y = y * s_ref[...] + t_ref[...]
    o_ref[0] = jnp.where(y >= 0, y, LEAKY_SLOPE * y).astype(o_ref.dtype)


def _sandwich_forward(x, weight, bias, gamma, beta, *, stride=1):
    """x: (N, C_in, L) f32; weight: (C_out, C_in, k); bias/gamma/beta: (C_out,)."""
    N, C_in, L = x.shape
    C_out, _, k = weight.shape
    pad = (k - 1) // 2                    # matches PyTorch; 'same' only for odd k
    L_out = (L + 2 * pad - k) // stride + 1

    # Conv bias deliberately unused: train-mode BatchNorm subtracts the batch
    # mean, so a per-channel pre-BN bias cancels exactly.
    del bias

    x_bf = x.astype(jnp.bfloat16)
    x_pad = jnp.pad(x_bf, ((0, 0), (0, 0), (pad, pad)))

    if stride == 1:
        # No-im2col path: conv = k shifted (C_out,C_in)@(C_in,TILE_L) matmuls.
        x_base = x_pad                                  # (N, C_in, L + 2*pad)
        w_eff = jnp.transpose(weight, (2, 0, 1))        # (k, C_out, C_in)
        k_eff, C_eff = k, C_in
    else:
        # TODO(synk): strided conv still materializes k shifted windows (k-fold
        # input duplication); an in-kernel strided load would remove it.
        span = stride * (L_out - 1) + 1
        windows = [x_pad[:, :, j:j + span:stride] for j in range(k)]
        x_base = jnp.stack(windows, axis=2).reshape(N, C_in * k, L_out)
        w_eff = weight.reshape(1, C_out, C_in * k)
        k_eff, C_eff = 1, C_in * k
    w_bf = w_eff.astype(jnp.bfloat16)

    # ---- tile sizing: big lane-dense tiles, sized against VMEM ----
    # bf16 input (double-buffered) + f32 output (double-buffered) + f32 y.
    bytes_per_col = 4 * C_eff + 12 * C_out
    tile_l = _round_down(max(_VMEM_TILE_BUDGET // bytes_per_col, 128), 128)
    tile_l = max(128, min(_MAX_TILE_L, tile_l, _round_up(L_out, 128)))
    L_out_pad = _round_up(L_out, tile_l)
    n_tiles = L_out_pad // tile_l
    halo = _round_up(k_eff - 1, 128) if k_eff > 1 else 0
    wt = tile_l + halo

    # Overlapping (halo'd) tiles, built once in glue and read by both passes:
    # keeps every in-kernel slice static and every store lane-dense/unmasked.
    # Zero-padded columns contribute exactly 0 to sum/sumsq (no bias), so the
    # batch statistics stay correct as long as we divide by the real N*L_out.
    need = n_tiles * tile_l + halo
    x_basep = jnp.pad(x_base, ((0, 0), (0, 0), (0, need - x_base.shape[2])))
    x_t = jnp.stack([x_basep[:, :, t * tile_l:t * tile_l + wt]
                     for t in range(n_tiles)], axis=1)   # (N, n_tiles, C_eff, wt)

    # ---- pass 1: per-channel sum / sum-of-squares over all output columns ----
    # Leading size-2 "parallel" axis so v7x can split the stats pass across both
    # TensorCores; each half accumulates into its own (C_out, 1) block.
    nt = N * n_tiles
    nt_half = _round_up(nt, 2) // 2
    x_flat = x_t.reshape(nt, C_eff, wt)
    if nt_half * 2 != nt:
        x_flat = jnp.pad(x_flat, ((0, 1), (0, 0), (0, 0)))   # zero tile: no-op

    stats_kernel = functools.partial(_stats_kernel, k_eff=k_eff, tile_l=tile_l)
    sum_p, sq_p = pl.pallas_call(
        stats_kernel,
        out_shape=(jax.ShapeDtypeStruct((2, C_out, 1), jnp.float32),
                   jax.ShapeDtypeStruct((2, C_out, 1), jnp.float32)),
        grid=(2, nt_half),
        in_specs=[pl.BlockSpec((1, C_eff, wt),
                               lambda c, i: (c * nt_half + i, 0, 0)),
                  pl.BlockSpec((k_eff, C_out, C_eff), lambda c, i: (0, 0, 0))],
        out_specs=(pl.BlockSpec((1, C_out, 1), lambda c, i: (c, 0, 0)),
                   pl.BlockSpec((1, C_out, 1), lambda c, i: (c, 0, 0))),
        compiler_params=pltpu.CompilerParams(
            dimension_semantics=("parallel", "arbitrary"),
            vmem_limit_bytes=_VMEM_LIMIT),
    )(x_flat, w_bf)

    # ---- tiny per-channel BN fold (plain JAX, C_out values) ----
    m_count = float(N * L_out)
    mean = (sum_p[0] + sum_p[1]) / m_count                       # (C_out, 1)
    var = jnp.maximum((sq_p[0] + sq_p[1]) / m_count - mean * mean, 0.0)
    scale = gamma.reshape(C_out, 1).astype(jnp.float32) * jax.lax.rsqrt(var + BN_EPS)
    shift = beta.reshape(C_out, 1).astype(jnp.float32) - mean * scale

    # ---- pass 2: conv tile + fused BN + LeakyReLU, written directly in NCL ----
    norm_kernel = functools.partial(_norm_kernel, k_eff=k_eff, tile_l=tile_l)
    out = pl.pallas_call(
        norm_kernel,
        out_shape=jax.ShapeDtypeStruct((N, C_out, L_out_pad), jnp.float32),
        grid=(N, n_tiles),
        in_specs=[pl.BlockSpec((1, 1, C_eff, wt), lambda n, t: (n, t, 0, 0)),
                  pl.BlockSpec((k_eff, C_out, C_eff), lambda n, t: (0, 0, 0)),
                  pl.BlockSpec((C_out, 1), lambda n, t: (0, 0)),
                  pl.BlockSpec((C_out, 1), lambda n, t: (0, 0))],
        out_specs=pl.BlockSpec((1, C_out, tile_l), lambda n, t: (n, 0, t)),
        compiler_params=pltpu.CompilerParams(
            dimension_semantics=("parallel", "parallel"),
            vmem_limit_bytes=_VMEM_LIMIT),
    )(x_t, w_bf, scale, shift)

    if L_out_pad != L_out:
        out = out[:, :, :L_out]
    return out                               # (N, C_out, L_out), f32


sandwich_forward = jax.jit(_sandwich_forward, static_argnames=("stride",))


if __name__ == "__main__":
    # Small shapes consistent with the Conv1d module input (N, C_in, L).
    N, C_in, C_out, L, k, stride = 2, 4, 8, 16, 3, 1

    key = jax.random.PRNGKey(0)
    kx, kw, kb = jax.random.split(key, 3)
    x = jax.random.normal(kx, (N, C_in, L), dtype=jnp.float32)

    # Deterministic parameter init (synthetic; mirrors nn.Conv1d/BatchNorm1d shapes).
    fan_in = C_in * k
    bound = 1.0 / (fan_in ** 0.5)
    weight = jax.random.uniform(kw, (C_out, C_in, k), minval=-bound, maxval=bound,
                                dtype=jnp.float32)
    bias = jax.random.uniform(kb, (C_out,), minval=-bound, maxval=bound,
                              dtype=jnp.float32)
    gamma = jnp.ones((C_out,), jnp.float32)   # BatchNorm1d weight init
    beta = jnp.zeros((C_out,), jnp.float32)   # BatchNorm1d bias init

    y = sandwich_forward(x, weight, bias, gamma, beta, stride=stride)
    jax.block_until_ready(y)
    assert y.shape == (N, C_out, L)
    print("KERNEL_OK")
</pallas_src>

<mosaic_0001>
module attributes {stable_mosaic.version = 11 : i64} {
  func.func @_stats_kernel(%arg0: i32, %arg1: i32, %arg2: memref<1x4x256xbf16, #tpu.memory_space<vmem>>, %arg3: memref<3x8x4xbf16, #tpu.memory_space<vmem>>, %arg4: memref<1x8x1xf32, #tpu.memory_space<vmem>>, %arg5: memref<1x8x1xf32, #tpu.memory_space<vmem>>) attributes {dimension_semantics = [#tpu.dimension_semantics<parallel>, #tpu.dimension_semantics<arbitrary>], iteration_bounds = array<i64: 2, 1>, scalar_prefetch = 0 : i64, scratch_operands = 0 : i64, tpu.core_type = #tpu.core_type<tc>, window_params = [{transform_indices = @transform_0, window_bounds = array<i64: 1, 4, 256>}, {pipeline_mode = #tpu.pipeline_mode<synchronous>, transform_indices = @transform_1, window_bounds = array<i64: 3, 8, 4>}, {transform_indices = @transform_2, window_bounds = array<i64: 1, 8, 1>}, {transform_indices = @transform_3, window_bounds = array<i64: 1, 8, 1>}]} {
    %c0_i32 = arith.constant 0 : i32
    %0 = arith.cmpi eq, %arg1, %c0_i32 : i32
    %1 = arith.extui %0 : i1 to i32
    %c0_i32_0 = arith.constant 0 : i32
    %2 = arith.cmpi ne, %1, %c0_i32_0 : i32
    scf.if %2 {
      %cst_26 = arith.constant 0.000000e+00 : f32
      %36 = vector.broadcast %cst_26 : f32 to vector<1x8x1xf32>
      %c0_27 = arith.constant 0 : index
      %c0_28 = arith.constant 0 : index
      %c0_29 = arith.constant 0 : index
      %37 = vector.load %arg4[%c0_27, %c0_28, %c0_29] : memref<1x8x1xf32, #tpu.memory_space<vmem>>, vector<1x8x1xf32>
      tpu.vector_store %arg4[%c0_27, %c0_28, %c0_29], %36 {strides = array<i32>} : memref<1x8x1xf32, #tpu.memory_space<vmem>>, vector<1x8x1xf32>,
      %cst_30 = arith.constant 0.000000e+00 : f32
      %38 = vector.broadcast %cst_30 : f32 to vector<1x8x1xf32>
      %c0_31 = arith.constant 0 : index
      %c0_32 = arith.constant 0 : index
      %c0_33 = arith.constant 0 : index
      %39 = vector.load %arg5[%c0_31, %c0_32, %c0_33] : memref<1x8x1xf32, #tpu.memory_space<vmem>>, vector<1x8x1xf32>
      tpu.vector_store %arg5[%c0_31, %c0_32, %c0_33], %38 {strides = array<i32>} : memref<1x8x1xf32, #tpu.memory_space<vmem>>, vector<1x8x1xf32>,
    } else {
    }
    %c0 = arith.constant 0 : index
    %c0_1 = arith.constant 0 : index
    %c0_2 = arith.constant 0 : index
    %3 = vector.load %arg2[%c0, %c0_1, %c0_2] : memref<1x4x256xbf16, #tpu.memory_space<vmem>>, vector<1x4x256xbf16>
    %4 = vector.shape_cast %3 : vector<1x4x256xbf16> to vector<4x256xbf16>
    %c0_3 = arith.constant 0 : index
    %c0_4 = arith.constant 0 : index
    %c0_5 = arith.constant 0 : index
    %5 = vector.load %arg3[%c0_3, %c0_4, %c0_5] : memref<3x8x4xbf16, #tpu.memory_space<vmem>>, vector<1x8x4xbf16>
    %6 = vector.shape_cast %5 : vector<1x8x4xbf16> to vector<8x4xbf16>
    %7 = vector.extract_strided_slice %4 {offsets = [0, 0], sizes = [4, 128], strides = [1, 1]} : vector<4x256xbf16> to vector<4x128xbf16>
    %cst = arith.constant dense<0.000000e+00> : vector<8x128xf32>
    %8 = tpu.matmul %6, %7, %cst {dimension_numbers = #tpu.dot_dimension_numbers<[1], [0], [0], [1], [0, 0, 1, 1], [], []>} : vector<8x4xbf16>, vector<4x128xbf16>, vector<8x128xf32> -> vector<8x128xf32>
    %c1 = arith.constant 1 : index
    %c0_6 = arith.constant 0 : index
    %c0_7 = arith.constant 0 : index
    %9 = vector.load %arg3[%c1, %c0_6, %c0_7] : memref<3x8x4xbf16, #tpu.memory_space<vmem>>, vector<1x8x4xbf16>
    %10 = vector.shape_cast %9 : vector<1x8x4xbf16> to vector<8x4xbf16>
    %11 = vector.extract_strided_slice %4 {offsets = [0, 1], sizes = [4, 128], strides = [1, 1]} : vector<4x256xbf16> to vector<4x128xbf16>
    %cst_8 = arith.constant dense<0.000000e+00> : vector<8x128xf32>
    %12 = tpu.matmul %10, %11, %cst_8 {dimension_numbers = #tpu.dot_dimension_numbers<[1], [0], [0], [1], [0, 0, 1, 1], [], []>} : vector<8x4xbf16>, vector<4x128xbf16>, vector<8x128xf32> -> vector<8x128xf32>
    %13 = arith.addf %8, %12 : vector<8x128xf32>
    %c2 = arith.constant 2 : index
    %c0_9 = arith.constant 0 : index
    %c0_10 = arith.constant 0 : index
    %14 = vector.load %arg3[%c2, %c0_9, %c0_10] : memref<3x8x4xbf16, #tpu.memory_space<vmem>>, vector<1x8x4xbf16>
    %15 = vector.shape_cast %14 : vector<1x8x4xbf16> to vector<8x4xbf16>
    %16 = vector.extract_strided_slice %4 {offsets = [0, 2], sizes = [4, 128], strides = [1, 1]} : vector<4x256xbf16> to vector<4x128xbf16>
    %cst_11 = arith.constant dense<0.000000e+00> : vector<8x128xf32>
    %17 = tpu.matmul %15, %16, %cst_11 {dimension_numbers = #tpu.dot_dimension_numbers<[1], [0], [0], [1], [0, 0, 1, 1], [], []>} : vector<8x4xbf16>, vector<4x128xbf16>, vector<8x128xf32> -> vector<8x128xf32>
    %18 = arith.addf %13, %17 : vector<8x128xf32>
    %c0_12 = arith.constant 0 : index
    %c0_13 = arith.constant 0 : index
    %c0_14 = arith.constant 0 : index
    %19 = vector.load %arg4[%c0_12, %c0_13, %c0_14] : memref<1x8x1xf32, #tpu.memory_space<vmem>>, vector<1x8x1xf32>
    %20 = vector.shape_cast %19 : vector<1x8x1xf32> to vector<8x1xf32>
    %cst_15 = arith.constant dense<0.000000e+00> : vector<8xf32>
    %21 = vector.multi_reduction <add>, %18, %cst_15 [1] : vector<8x128xf32> to vector<8xf32>
    %22 = vector.shape_cast %21 : vector<8xf32> to vector<8x1xf32>
    %23 = arith.addf %20, %22 : vector<8x1xf32>
    %c0_16 = arith.constant 0 : index
    %c0_17 = arith.constant 0 : index
    %c0_18 = arith.constant 0 : index
    %24 = vector.load %arg4[%c0_16, %c0_17, %c0_18] : memref<1x8x1xf32, #tpu.memory_space<vmem>>, vector<1x8x1xf32>
    %25 = vector.shape_cast %24 : vector<1x8x1xf32> to vector<8x1xf32>
    %26 = vector.shape_cast %23 : vector<8x1xf32> to vector<1x8x1xf32>
    tpu.vector_store %arg4[%c0_16, %c0_17, %c0_18], %26 {strides = array<i32>} : memref<1x8x1xf32, #tpu.memory_space<vmem>>, vector<1x8x1xf32>,
    %c0_19 = arith.constant 0 : index
    %c0_20 = arith.constant 0 : index
    %c0_21 = arith.constant 0 : index
    %27 = vector.load %arg5[%c0_19, %c0_20, %c0_21] : memref<1x8x1xf32, #tpu.memory_space<vmem>>, vector<1x8x1xf32>
    %28 = vector.shape_cast %27 : vector<1x8x1xf32> to vector<8x1xf32>
    %29 = arith.mulf %18, %18 : vector<8x128xf32>
    %cst_22 = arith.constant dense<0.000000e+00> : vector<8xf32>
    %30 = vector.multi_reduction <add>, %29, %cst_22 [1] : vector<8x128xf32> to vector<8xf32>
    %31 = vector.shape_cast %30 : vector<8xf32> to vector<8x1xf32>
    %32 = arith.addf %28, %31 : vector<8x1xf32>
    %c0_23 = arith.constant 0 : index
    %c0_24 = arith.constant 0 : index
    %c0_25 = arith.constant 0 : index
    %33 = vector.load %arg5[%c0_23, %c0_24, %c0_25] : memref<1x8x1xf32, #tpu.memory_space<vmem>>, vector<1x8x1xf32>
    %34 = vector.shape_cast %33 : vector<1x8x1xf32> to vector<8x1xf32>
    %35 = vector.shape_cast %32 : vector<8x1xf32> to vector<1x8x1xf32>
    tpu.vector_store %arg5[%c0_23, %c0_24, %c0_25], %35 {strides = array<i32>} : memref<1x8x1xf32, #tpu.memory_space<vmem>>, vector<1x8x1xf32>,
    return
  }
  func.func @transform_0(%arg0: i32, %arg1: i32) -> (i32, i32, i32) {
    %c1_i32 = arith.constant 1 : i32
    %0 = arith.muli %arg0, %c1_i32 : i32
    %1 = arith.addi %0, %arg1 : i32
    %c0_i32 = arith.constant 0 : i32
    %c0_i32_0 = arith.constant 0 : i32
    %c0_i32_1 = arith.constant 0 : i32
    return %1, %c0_i32, %c0_i32_0 : i32, i32, i32
  }
  func.func @transform_1(%arg0: i32, %arg1: i32) -> (i32, i32, i32) {
    %c0_i32 = arith.constant 0 : i32
    %c0_i32_0 = arith.constant 0 : i32
    %c0_i32_1 = arith.constant 0 : i32
    %c0_i32_2 = arith.constant 0 : i32
    return %c0_i32, %c0_i32_0, %c0_i32_1 : i32, i32, i32
  }
  func.func @transform_2(%arg0: i32, %arg1: i32) -> (i32, i32, i32) {
    %c0_i32 = arith.constant 0 : i32
    %c0_i32_0 = arith.constant 0 : i32
    %c0_i32_1 = arith.constant 0 : i32
    return %arg0, %c0_i32, %c0_i32_0 : i32, i32, i32
  }
  func.func @transform_3(%arg0: i32, %arg1: i32) -> (i32, i32, i32) {
    %c0_i32 = arith.constant 0 : i32
    %c0_i32_0 = arith.constant 0 : i32
    %c0_i32_1 = arith.constant 0 : i32
    return %arg0, %c0_i32, %c0_i32_0 : i32, i32, i32
  }
}

module attributes {stable_mosaic.version = 11 : i64} {
  func.func @_norm_kernel(%arg0: i32, %arg1: i32, %arg2: memref<1x1x4x256xbf16, #tpu.memory_space<vmem>>, %arg3: memref<3x8x4xbf16, #tpu.memory_space<vmem>>, %arg4: memref<8x1xf32, #tpu.memory_space<vmem>>, %arg5: memref<8x1xf32, #tpu.memory_space<vmem>>, %arg6: memref<1x8x128xf32, #tpu.memory_space<vmem>>) attributes {dimension_semantics = [#tpu.dimension_semantics<parallel>, #tpu.dimension_semantics<parallel>], iteration_bounds = array<i64: 2, 1>, scalar_prefetch = 0 : i64, scratch_operands = 0 : i64, tpu.core_type = #tpu.core_type<tc>, window_params = [{transform_indices = @transform_0, window_bounds = array<i64: 1, 1, 4, 256>}, {pipeline_mode = #tpu.pipeline_mode<synchronous>, transform_indices = @transform_1, window_bounds = array<i64: 3, 8, 4>}, {pipeline_mode = #tpu.pipeline_mode<synchronous>, transform_indices = @transform_2, window_bounds = array<i64: 8, 1>}, {pipeline_mode = #tpu.pipeline_mode<synchronous>, transform_indices = @transform_3, window_bounds = array<i64: 8, 1>}, {transform_indices = @transform_4, window_bounds = array<i64: 1, 8, 128>}]} {
    %c0 = arith.constant 0 : index
    %c0_0 = arith.constant 0 : index
    %c0_1 = arith.constant 0 : index
    %c0_2 = arith.constant 0 : index
    %0 = vector.load %arg2[%c0, %c0_0, %c0_1, %c0_2] : memref<1x1x4x256xbf16, #tpu.memory_space<vmem>>, vector<1x1x4x256xbf16>
    %1 = vector.shape_cast %0 : vector<1x1x4x256xbf16> to vector<4x256xbf16>
    %c0_3 = arith.constant 0 : index
    %c0_4 = arith.constant 0 : index
    %c0_5 = arith.constant 0 : index
    %2 = vector.load %arg3[%c0_3, %c0_4, %c0_5] : memref<3x8x4xbf16, #tpu.memory_space<vmem>>, vector<1x8x4xbf16>
    %3 = vector.shape_cast %2 : vector<1x8x4xbf16> to vector<8x4xbf16>
    %4 = vector.extract_strided_slice %1 {offsets = [0, 0], sizes = [4, 128], strides = [1, 1]} : vector<4x256xbf16> to vector<4x128xbf16>
    %cst = arith.constant dense<0.000000e+00> : vector<8x128xf32>
    %5 = tpu.matmul %3, %4, %cst {dimension_numbers = #tpu.dot_dimension_numbers<[1], [0], [0], [1], [0, 0, 1, 1], [], []>} : vector<8x4xbf16>, vector<4x128xbf16>, vector<8x128xf32> -> vector<8x128xf32>
    %c1 = arith.constant 1 : index
    %c0_6 = arith.constant 0 : index
    %c0_7 = arith.constant 0 : index
    %6 = vector.load %arg3[%c1, %c0_6, %c0_7] : memref<3x8x4xbf16, #tpu.memory_space<vmem>>, vector<1x8x4xbf16>
    %7 = vector.shape_cast %6 : vector<1x8x4xbf16> to vector<8x4xbf16>
    %8 = vector.extract_strided_slice %1 {offsets = [0, 1], sizes = [4, 128], strides = [1, 1]} : vector<4x256xbf16> to vector<4x128xbf16>
    %cst_8 = arith.constant dense<0.000000e+00> : vector<8x128xf32>
    %9 = tpu.matmul %7, %8, %cst_8 {dimension_numbers = #tpu.dot_dimension_numbers<[1], [0], [0], [1], [0, 0, 1, 1], [], []>} : vector<8x4xbf16>, vector<4x128xbf16>, vector<8x128xf32> -> vector<8x128xf32>
    %10 = arith.addf %5, %9 : vector<8x128xf32>
    %c2 = arith.constant 2 : index
    %c0_9 = arith.constant 0 : index
    %c0_10 = arith.constant 0 : index
    %11 = vector.load %arg3[%c2, %c0_9, %c0_10] : memref<3x8x4xbf16, #tpu.memory_space<vmem>>, vector<1x8x4xbf16>
    %12 = vector.shape_cast %11 : vector<1x8x4xbf16> to vector<8x4xbf16>
    %13 = vector.extract_strided_slice %1 {offsets = [0, 2], sizes = [4, 128], strides = [1, 1]} : vector<4x256xbf16> to vector<4x128xbf16>
    %cst_11 = arith.constant dense<0.000000e+00> : vector<8x128xf32>
    %14 = tpu.matmul %12, %13, %cst_11 {dimension_numbers = #tpu.dot_dimension_numbers<[1], [0], [0], [1], [0, 0, 1, 1], [], []>} : vector<8x4xbf16>, vector<4x128xbf16>, vector<8x128xf32> -> vector<8x128xf32>
    %15 = arith.addf %10, %14 : vector<8x128xf32>
    %c0_12 = arith.constant 0 : index
    %c0_13 = arith.constant 0 : index
    %16 = vector.load %arg4[%c0_12, %c0_13] : memref<8x1xf32, #tpu.memory_space<vmem>>, vector<8x1xf32>
    %17 = vector.broadcast %16 : vector<8x1xf32> to vector<8x128xf32>
    %18 = arith.mulf %15, %17 : vector<8x128xf32>
    %c0_14 = arith.constant 0 : index
    %c0_15 = arith.constant 0 : index
    %19 = vector.load %arg5[%c0_14, %c0_15] : memref<8x1xf32, #tpu.memory_space<vmem>>, vector<8x1xf32>
    %20 = vector.broadcast %19 : vector<8x1xf32> to vector<8x128xf32>
    %21 = arith.addf %18, %20 : vector<8x128xf32>
    %cst_16 = arith.constant 0.000000e+00 : f32
    %22 = vector.broadcast %cst_16 : f32 to vector<8x128xf32>
    %23 = arith.cmpf oge, %21, %22 : vector<8x128xf32>
    %cst_17 = arith.constant 2.000000e-01 : f32
    %24 = vector.broadcast %cst_17 : f32 to vector<8x128xf32>
    %25 = arith.mulf %24, %21 : vector<8x128xf32>
    %26 = arith.select %23, %21, %25 : vector<8x128xi1>, vector<8x128xf32>
    %c0_18 = arith.constant 0 : index
    %c0_19 = arith.constant 0 : index
    %c0_20 = arith.constant 0 : index
    %27 = vector.load %arg6[%c0_18, %c0_19, %c0_20] : memref<1x8x128xf32, #tpu.memory_space<vmem>>, vector<1x8x128xf32>
    %28 = vector.shape_cast %27 : vector<1x8x128xf32> to vector<8x128xf32>
    %29 = vector.shape_cast %26 : vector<8x128xf32> to vector<1x8x128xf32>
    tpu.vector_store %arg6[%c0_18, %c0_19, %c0_20], %29 {strides = array<i32>} : memref<1x8x128xf32, #tpu.memory_space<vmem>>, vector<1x8x128xf32>,
    return
  }
  func.func @transform_0(%arg0: i32, %arg1: i32) -> (i32, i32, i32, i32) {
    %c0_i32 = arith.constant 0 : i32
    %c0_i32_0 = arith.constant 0 : i32
    %c0_i32_1 = arith.constant 0 : i32
    return %arg0, %arg1, %c0_i32, %c0_i32_0 : i32, i32, i32, i32
  }
  func.func @transform_1(%arg0: i32, %arg1: i32) -> (i32, i32, i32) {
    %c0_i32 = arith.constant 0 : i32
    %c0_i32_0 = arith.constant 0 : i32
    %c0_i32_1 = arith.constant 0 : i32
    %c0_i32_2 = arith.constant 0 : i32
    return %c0_i32, %c0_i32_0, %c0_i32_1 : i32, i32, i32
  }
  func.func @transform_2(%arg0: i32, %arg1: i32) -> (i32, i32) {
    %c0_i32 = arith.constant 0 : i32
    %c0_i32_0 = arith.constant 0 : i32
    %c0_i32_1 = arith.constant 0 : i32
    return %c0_i32, %c0_i32_0 : i32, i32
  }
  func.func @transform_3(%arg0: i32, %arg1: i32) -> (i32, i32) {
    %c0_i32 = arith.constant 0 : i32
    %c0_i32_0 = arith.constant 0 : i32
    %c0_i32_1 = arith.constant 0 : i32
    return %c0_i32, %c0_i32_0 : i32, i32
  }
  func.func @transform_4(%arg0: i32, %arg1: i32) -> (i32, i32, i32) {
    %c0_i32 = arith.constant 0 : i32
    %c0_i32_0 = arith.constant 0 : i32
    return %arg0, %c0_i32, %arg1 : i32, i32, i32
  }
}

</mosaic_0001>

<llo_original>
// kernel: _sandwich_forward.2
$region0: #{_sandwich_forward.2}
  #allocation0 [shape = 'u32[]', space=smem, size = 0x4, offset = 0x4, fixed_abs, tag = 'smem constant byte address 0x4 - core index']
  #allocation1 [shape = 'u32[72,128]{1,0:T(1,128)}', space=vmem, size = 0x9000, scoped, tag = 'internal scratch']
  %s0 = inlined_call_operand.vmem [shape: bf16[2,4,256], index: 0, kind: input, shape index: {}]
  %s1 = inlined_call_operand.vmem [shape: bf16[3,8,4], index: 1, kind: input, shape index: {}]
  %s2 = inlined_call_operand.vmem [shape: f32[2,8,1], index: 2, kind: output, shape index: {0}]
  %s3 = inlined_call_operand.vmem [shape: f32[2,8,1], index: 3, kind: output, shape index: {1}]
  %4 = xla_tuple %s2, %s3
  %s5 = sld [smem:[#allocation0]]
  $region53: #{_sandwich_forward.2} parent=0
    _
  %s7 = ssub.s32 1, %s5
  %s8 = scalar_select 0, %s7, %s5
  loop: start=0, step=1, limit=4
  $region2: #{_sandwich_forward.2} parent=0 // loop_pre_header
    _
  $region3: #{_sandwich_forward.2} parent=0 // loop_header
    %s10 = sphi 0, %s14
    %p11 = scmp.ge.s32.totalorder %s10, 4
    %s17 = sphi 0, %s29
    %s18 = sphi 0, %s25
    %s19 = sphi 0, %s17
    %s20 = sphi 0, %s18
    %s21 = sphi 0, %s19
    %s22 = sphi 0, %s20
    %s34 = sphi 0, %s36
    %s37 = sphi 0, %s34
    %s38 = sphi 0, %s37
    %s54 = sphi 0, %s38
    %s58 = sphi 0, %s58
    %s60 = sphi 0, %s58
    %s61 = sphi 0, %s60
    %s75 = sphi 0, %s61
    %s81 = sphi 0, %s83
    %s84 = sphi 0, %s81
    %s85 = sphi 0, %s84
    %s101 = sphi 0, %s85
    %s107 = sphi 0, %s109
    %s110 = sphi 0, %s107
    %s111 = sphi 0, %s110
    %s127 = sphi 0, %s111
  $region4: #{_sandwich_forward.2} parent=0 // loop_header_branch
    %13 = sbr.rel (%p11) target = $region8
  $region5: #{_sandwich_forward.2} parent=0 // loop_body
    %s15 = ssub.s32 %s10, 1
    %s16 = ssub.s32 %s10, 2
    %s23 = sadd.s32 1, %s18
    %p24 = scmp.ge.s32.totalorder %s23, 1
    %s25 = scalar_select %p24, 0, %s23
    %s26 = sadd.s32 1, %s17
    %s27 = scalar_select %p24, %s26, %s17
    %p28 = scmp.ge.s32.totalorder %s27, 2
    %s29 = scalar_select %p28, 0, %s27
    %s30 = sadd.s32 %s17, %s18
    %s31 = sadd.s32 %s29, %s25
    %s32 = ssub.s32 %s30, %s31
    %p33 = scmp.eq.s32.totalorder %s32, 0
    %s35 = sadd.s32 %s34, 1
    %s36 = scalar_select %p33, %s34, %s35
    %p39 = pneg %p33
    %p40 = scmp.eq.s32.totalorder %s10, 1
    %p41 = por %p39, %p40
    %p42 = scmp.ne.s32.totalorder %s34, %s37
    %p43 = scmp.eq.s32.totalorder %s10, 0
    %p44 = por %p42, %p43
    %p45 = scmp.ne.s32.totalorder %s34, %s37
    %p46 = scmp.eq.s32.totalorder %s15, 1
    %p47 = por %p45, %p46
    %p48 = scmp.ne.s32.totalorder %s37, %s38
    %p49 = scmp.eq.s32.totalorder %s15, 0
    %p50 = por %p48, %p49
    %p51 = scmp.ne.s32.totalorder %s37, %s38
    %p52 = scmp.eq.s32.totalorder %s16, 1
    %p53 = por %p51, %p52
    %p55 = scmp.ne.s32.totalorder %s38, %s54
    %p56 = scmp.eq.s32.totalorder %s16, 0
    %p57 = por %p55, %p56
    %s59 = sadd.s32 %s58, 1
    %p62 = scmp.eq.s32.totalorder %s10, 1
    %p63 = scmp.ne.s32.totalorder %s58, %s60
    %p64 = scmp.eq.s32.totalorder %s10, 0
    %p65 = por %p63, %p64
    %p66 = scmp.ne.s32.totalorder %s58, %s60
    %p67 = scmp.eq.s32.totalorder %s15, 1
    %p68 = por %p66, %p67
    %p69 = scmp.ne.s32.totalorder %s60, %s61
    %p70 = scmp.eq.s32.totalorder %s15, 0
    %p71 = por %p69, %p70
    %p72 = scmp.ne.s32.totalorder %s60, %s61
    %p73 = scmp.eq.s32.totalorder %s16, 1
    %p74 = por %p72, %p73
    %p76 = scmp.ne.s32.totalorder %s61, %s75
    %p77 = scmp.eq.s32.totalorder %s16, 0
    %p78 = por %p76, %p77
    %s79 = ssub.s32 %s17, %s29
    %p80 = scmp.eq.s32.totalorder %s79, 0
    %s82 = sadd.s32 %s81, 1
    %s83 = scalar_select %p80, %s81, %s82
    %p86 = pneg %p80
    %p87 = scmp.eq.s32.totalorder %s10, 1
    %p88 = por %p86, %p87
    %p89 = scmp.ne.s32.totalorder %s81, %s84
    %p90 = scmp.eq.s32.totalorder %s10, 0
    %p91 = por %p89, %p90
    %p92 = scmp.ne.s32.totalorder %s81, %s84
    %p93 = scmp.eq.s32.totalorder %s15, 1
    %p94 = por %p92, %p93
    %p95 = scmp.ne.s32.totalorder %s84, %s85
    %p96 = scmp.eq.s32.totalorder %s15, 0
    %p97 = por %p95, %p96
    %p98 = scmp.ne.s32.totalorder %s84, %s85
    %p99 = scmp.eq.s32.totalorder %s16, 1
    %p100 = por %p98, %p99
    %p102 = scmp.ne.s32.totalorder %s85, %s101
    %p103 = scmp.eq.s32.totalorder %s16, 0
    %p104 = por %p102, %p103
    %s105 = ssub.s32 %s17, %s29
    %p106 = scmp.eq.s32.totalorder %s105, 0
    %s108 = sadd.s32 %s107, 1
    %s109 = scalar_select %p106, %s107, %s108
    %p112 = pneg %p106
    %p113 = scmp.eq.s32.totalorder %s10, 1
    %p114 = por %p112, %p113
    %p115 = scmp.ne.s32.totalorder %s107, %s110
    %p116 = scmp.eq.s32.totalorder %s10, 0
    %p117 = por %p115, %p116
    %p118 = scmp.ne.s32.totalorder %s107, %s110
    %p119 = scmp.eq.s32.totalorder %s15, 1
    %p120 = por %p118, %p119
    %p121 = scmp.ne.s32.totalorder %s110, %s111
    %p122 = scmp.eq.s32.totalorder %s15, 0
    %p123 = por %p121, %p122
    %p124 = scmp.ne.s32.totalorder %s110, %s111
    %p125 = scmp.eq.s32.totalorder %s16, 1
    %p126 = por %p124, %p125
    %p128 = scmp.ne.s32.totalorder %s111, %s127
    %p129 = scmp.eq.s32.totalorder %s16, 0
    %p130 = por %p128, %p129
    %p131 = scmp.le.s32.totalorder 1, %s10
    %p132 = scmp.lt.s32.totalorder %s10, 3
    %p133 = pnand %p131, %p132
    %p134 = pneg %p133
    // Predicated region
    $region9: #{_sandwich_forward.2} parent=5 // pred_check
      _
    $region10: #{_sandwich_forward.2} parent=5 // pred_check_branch
      %136 = sbr.rel (%p133) target = $region12
    $region11: #{_sandwich_forward.2} parent=5 // pred_region
      %s137 = ssub.s32 %s10, 1
      // Predicated region
      $region13: #{_sandwich_forward.2} parent=11 // pred_check
        %p138 = pneg %p71
      $region14: #{_sandwich_forward.2} parent=11 // pred_check_branch
        %140 = sbr.rel (%p138) target = $region16
      $region15: #{_sandwich_forward.2} parent=11 // pred_region
        _
      $region16: #{_sandwich_forward.2} parent=11 // pred_fallthru
        _
    $region12: #{_sandwich_forward.2} parent=5 // pred_fallthru
      _
    %p141 = scmp.lt.s32.totalorder %s10, 2
    // Predicated region
    $region17: #{_sandwich_forward.2} parent=5 // pred_check
      %p142 = pneg %p141
    $region18: #{_sandwich_forward.2} parent=5 // pred_check_branch
      %144 = sbr.rel (%p142) target = $region20
    $region19: #{_sandwich_forward.2} parent=5 // pred_region
      // Predicated region
      $region21: #{_sandwich_forward.2} parent=19 // pred_check
        %p145 = pneg %p44
      $region22: #{_sandwich_forward.2} parent=19 // pred_check_branch
        %147 = sbr.rel (%p145) target = $region24
      $region23: #{_sandwich_forward.2} parent=19 // pred_region
        %s148 = sadd.s32 %s17, %s18
        %p149 = scmp.lt.s32.totalorder %s148, 1
        %s150 = scalar_select %p149, %s148, 1
        %s151 = smul.addr %s150, 2
        %s152 = smul.addr %s151, 2
        %s153 = scalar_lea.vmem %s0, %s152
        %s154 = sadd.s32 %s17, %s18
      $region24: #{_sandwich_forward.2} parent=19 // pred_fallthru
        _
    $region20: #{_sandwich_forward.2} parent=5 // pred_fallthru
      _
    %p155 = scmp.le.s32.totalorder 1, %s10
    %p156 = scmp.lt.s32.totalorder %s10, 3
    %p157 = pnand %p155, %p156
    %p158 = pneg %p157
    // Predicated region
    $region25: #{_sandwich_forward.2} parent=5 // pred_check
      _
    $region26: #{_sandwich_forward.2} parent=5 // pred_check_branch
      %160 = sbr.rel (%p157) target = $region28
    $region27: #{_sandwich_forward.2} parent=5 // pred_region
      %s161 = ssub.s32 %s10, 1
      %s162 = sadd.s32 %s19, %s20
      %p163 = scmp.lt.s32.totalorder %s162, 1
      %s164 = scalar_select %p163, %s162, 1
      %s165 = smul.addr %s164, 2
      %s166 = smul.addr %s165, 2
      %s167 = scalar_lea.vmem %s0, %s166
      %p168 = pneg %p50
      %p169 = pneg %p47
      %p170 = pneg %p71
      %p171 = pneg %p68
      %p172 = pneg %p97
      %p173 = pneg %p94
      %p174 = scmp.lt.s32.totalorder %s19, 1
      %s175 = scalar_select %p174, %s19, 1
      %s176 = smul.addr %s175, 8
      %s177 = scalar_lea.vmem %s2, %s176
      %p178 = pneg %p123
      %p179 = pneg %p120
      %p180 = scmp.lt.s32.totalorder %s19, 1
      %s181 = scalar_select %p180, %s19, 1
      %s182 = smul.addr %s181, 8
      %s183 = scalar_lea.vmem %s3, %s182
      %s184 = sadd.s32 %s19, %s20
      %p185 = scmp.lt.s32.totalorder %s184, 1
      %s186 = scalar_select %p185, %s184, 1
      %s187 = smul.addr %s186, 2
      %s188 = smul.addr %s187, 2
      %s189 = scalar_lea.vmem %s0, %s188
      %s190 = sadd.s32 %s19, %s20
      %p191 = scmp.lt.s32.totalorder %s19, 1
      %s192 = scalar_select %p191, %s19, 1
      %s193 = smul.addr %s192, 8
      %s194 = scalar_lea.vmem %s2, %s193
      %p195 = scmp.lt.s32.totalorder %s19, 1
      %s196 = scalar_select %p195, %s19, 1
      %s197 = smul.addr %s196, 8
      %s198 = scalar_lea.vmem %s3, %s197
      %p200 = scmp.eq.s32.totalorder %s20, 0
      // Predicated region
      $region29: #{_sandwich_forward.2} parent=27 // pred_check
        %p201 = pneg %p200
      $region30: #{_sandwich_forward.2} parent=27 // pred_check_branch
        %203 = sbr.rel (%p201) target = $region32
      $region31: #{_sandwich_forward.2} parent=27 // pred_region
        %vm204 = vcmask 7168
        %205 = vst.msk [vmem:[%s194] sm:$0xff] %vm204, 0.0
        %206 = vst.msk [vmem:[%s198] sm:$0xff] %vm204, 0.0
      $region32: #{_sandwich_forward.2} parent=27 // pred_fallthru
        _
      %v207 = vld [vmem:[%s189] sm:$0xf]
      %v208 = vld [vmem:[%s1] sm:$0xf]
      %s209 = scalar_lea.vmem %s1, 4
      %v210 = vld [vmem:[%s209] sm:$0xf]
      %212 = vst [vmem:[#allocation1] ss:$4 sm:$0xff] %v207
      %v213 = vld.sshfl [vmem:[#allocation1] sm:$0xff pattern:$0x73625140]
      %v215 = vld.sshfl [vmem:[#allocation1 + $0x8] sm:$0xff pattern:$0x73625140]
      %217 = vrot.lane.b32.xlu0 %v213, 127
      %v218 = vpop.permute.xlu0 %217
      %219 = vrot.lane.b32.xlu0 %v215, 127
      %v220 = vpop.permute.xlu0 %219
      %vm221 = vcmask 1039360
      %v222 = vsel %vm221, %v218, %v220
      %vm223 = vcmask 31744
      %v225 = vsel %vm223, %v210, 0
      %vm227 = vcmask 1041408
      %v229 = vsel %vm227, %v222, 0
      %231 = vmatpush.bf16.msra.mxu0 0
      %232 = vmatpush.bf16.msra.mxu0 0
      %233 = vmatpush.bf16.msra.mxu0 0
      %234 = vmatpush.bf16.msra.mxu0 0
      %235 = vmatpush.bf16.msra.mxu0 0
      %236 = vmatpush.bf16.msra.mxu0 0
      %237 = vmatpush.bf16.msra.mxu0 0
      %238 = vmatpush.bf16.msra.mxu0 %v229
      %239 = vmatmul.bf16.gmra.mxu0 %v225
      %v240 = vpop.f32.mrf.mxu0
      %v241 = vadd.f32 0.0, %v240
      %v242 = vpop.f32.mrf.mxu0
      %243 = vdwg.mxu0
      %v245 = vsel %vm223, %v208, 0
      %v247 = vsel %vm227, %v207, 0
      %249 = vmatpush.bf16.msra.mxu0 0
      %250 = vmatpush.bf16.msra.mxu0 0
      %251 = vmatpush.bf16.msra.mxu0 0
      %252 = vmatpush.bf16.msra.mxu0 0
      %253 = vmatpush.bf16.msra.mxu0 0
      %254 = vmatpush.bf16.msra.mxu0 0
      %255 = vmatpush.bf16.msra.mxu0 0
      %256 = vmatpush.bf16.msra.mxu0 %v247
      %257 = vmatmul.bf16.gmra.mxu0 %v245
      %v258 = vpop.f32.mrf.mxu0
      %v259 = vadd.f32 %v241, %v258
      %v260 = vpop.f32.mrf.mxu0
      %261 = vdwg.mxu0
      %s262 = scalar_lea.vmem %s1, 8
      %v263 = vld [vmem:[%s262] sm:$0xf]
      %264 = vst [vmem:[#allocation1] ss:$4 sm:$0xff] %v207
      %v265 = vld.sshfl [vmem:[#allocation1] sm:$0xff pattern:$0x73625140]
      %v267 = vld.sshfl [vmem:[#allocation1 + $0x8] sm:$0xff pattern:$0x73625140]
      %269 = vrot.lane.b32.xlu0 %v265, 126
      %v270 = vpop.permute.xlu0 %269
      %271 = vrot.lane.b32.xlu0 %v267, 126
      %v272 = vpop.permute.xlu0 %271
      %vm273 = vcmask 1031168
      %v274 = vsel %vm273, %v270, %v272
      %v276 = vsel %vm223, %v263, 0
      %v279 = vsel %vm227, %v274, 0
      %281 = vmatpush.bf16.msra.mxu0 0
      %282 = vmatpush.bf16.msra.mxu0 0
      %283 = vmatpush.bf16.msra.mxu0 0
      %284 = vmatpush.bf16.msra.mxu0 0
      %285 = vmatpush.bf16.msra.mxu0 0
      %286 = vmatpush.bf16.msra.mxu0 0
      %287 = vmatpush.bf16.msra.mxu0 0
      %288 = vmatpush.bf16.msra.mxu0 %v279
      %289 = vmatmul.bf16.gmra.mxu0 %v276
      %v290 = vpop.f32.mrf.mxu0
      %v291 = vadd.f32 0.0, %v290
      %v292 = vpop.f32.mrf.mxu0
      %293 = vdwg.mxu0
      %v294 = vadd.f32 %v259, %v291
      %v295 = vld [vmem:[%s194] sm:$0xff]
      %296 = vadd.xlane.f32.xlu0 %v294
      %v297 = vpop.xlane.xlu0 %296
      %v298 = vadd.f32 %v295, %v297
      %vm299 = vcmask 7168
      %300 = vst.msk [vmem:[%s194] sm:$0xff] %vm299, %v298
      %v301 = vld [vmem:[%s198] sm:$0xff]
      %v302 = vmul.f32 %v294, %v294
      %303 = vadd.xlane.f32.xlu0 %v302
      %v304 = vpop.xlane.xlu0 %303
      %v305 = vadd.f32 %v301, %v304
      %306 = vst.msk [vmem:[%s198] sm:$0xff] %vm299, %v305
      %p307 = scmp.lt.s32.totalorder %s19, 1
      %s308 = scalar_select %p307, %s19, 1
      %s309 = smul.addr %s308, 8
      %s310 = scalar_lea.vmem %s2, %s309
      %p311 = scmp.lt.s32.totalorder %s19, 1
      %s312 = scalar_select %p311, %s19, 1
      %s313 = smul.addr %s312, 8
      %s314 = scalar_lea.vmem %s3, %s313
      // Predicated region
      $region33: #{_sandwich_forward.2} parent=27 // pred_check
        %p315 = pneg %p94
      $region34: #{_sandwich_forward.2} parent=27 // pred_check_branch
        %317 = sbr.rel (%p315) target = $region36
      $region35: #{_sandwich_forward.2} parent=27 // pred_region
        _
      $region36: #{_sandwich_forward.2} parent=27 // pred_fallthru
        _
      // Predicated region
      $region37: #{_sandwich_forward.2} parent=27 // pred_check
        %p318 = pneg %p120
      $region38: #{_sandwich_forward.2} parent=27 // pred_check_branch
        %320 = sbr.rel (%p318) target = $region40
      $region39: #{_sandwich_forward.2} parent=27 // pred_region
        _
      $region40: #{_sandwich_forward.2} parent=27 // pred_fallthru
        _
    $region28: #{_sandwich_forward.2} parent=5 // pred_fallthru
      _
    %p321 = scmp.le.s32.totalorder 2, %s10
    // Predicated region
    $region41: #{_sandwich_forward.2} parent=5 // pred_check
      %p322 = pneg %p321
    $region42: #{_sandwich_forward.2} parent=5 // pred_check_branch
      %324 = sbr.rel (%p322) target = $region44
    $region43: #{_sandwich_forward.2} parent=5 // pred_region
      %s325 = ssub.s32 %s10, 2
      // Predicated region
      $region45: #{_sandwich_forward.2} parent=43 // pred_check
        %p326 = pneg %p100
      $region46: #{_sandwich_forward.2} parent=43 // pred_check_branch
        %328 = sbr.rel (%p326) target = $region48
      $region47: #{_sandwich_forward.2} parent=43 // pred_region
        %p329 = scmp.lt.s32.totalorder %s21, 1
        %s330 = scalar_select %p329, %s21, 1
        %s331 = smul.addr %s330, 8
        %s332 = scalar_lea.vmem %s2, %s331
      $region48: #{_sandwich_forward.2} parent=43 // pred_fallthru
        _
      // Predicated region
      $region49: #{_sandwich_forward.2} parent=43 // pred_check
        %p333 = pneg %p126
      $region50: #{_sandwich_forward.2} parent=43 // pred_check_branch
        %335 = sbr.rel (%p333) target = $region52
      $region51: #{_sandwich_forward.2} parent=43 // pred_region
        %p336 = scmp.lt.s32.totalorder %s21, 1
        %s337 = scalar_select %p336, %s21, 1
        %s338 = smul.addr %s337, 8
        %s339 = scalar_lea.vmem %s3, %s338
      $region52: #{_sandwich_forward.2} parent=43 // pred_fallthru
        _
    $region44: #{_sandwich_forward.2} parent=5 // pred_fallthru
      _
  $region6: #{_sandwich_forward.2} parent=0 // loop_footer
    %s14 = sadd.s32 1, %s10
  $region7: #{_sandwich_forward.2} parent=0 // loop_footer_branch
    %9 = sbr.rel target = $region3
  $region8: #{_sandwich_forward.2} parent=0 // loop_exit
    _

// kernel: _sandwich_forward.3
$region0: #{_sandwich_forward.3}
  #allocation0 [shape = 'u32[]', space=smem, size = 0x4, offset = 0x4, fixed_abs, tag = 'smem constant byte address 0x4 - core index']
  #allocation1 [shape = 'u32[72,128]{1,0:T(1,128)}', space=vmem, size = 0x9000, scoped, tag = 'internal scratch']
  %s0 = inlined_call_operand.vmem [shape: bf16[2,1,4,256], index: 0, kind: input, shape index: {}]
  %s1 = inlined_call_operand.vmem [shape: bf16[3,8,4], index: 1, kind: input, shape index: {}]
  %s2 = inlined_call_operand.vmem [shape: f32[8,1], index: 2, kind: input, shape index: {}]
  %s3 = inlined_call_operand.vmem [shape: f32[8,1], index: 3, kind: input, shape index: {}]
  %s4 = inlined_call_operand.hbm [shape: f32[2,8,128], index: 4, kind: output, shape index: {}]
  %s5 = sld [smem:[#allocation0]]
  $region49: #{_sandwich_forward.3} parent=0
    _
  %s7 = ssub.s32 1, %s5
  %s8 = scalar_select 0, %s7, %s5
  $region1: #{_sandwich_forward.3} parent=0
    #allocation2 [shape = 'u8[8192]{0}', space=vmem, size = 0x2000, scoped, tag = 'output window, operand 0']
    #allocation3 [shape = 's32[2]{0}', space=sflag, size = 0x8, scoped, tag = 'scoped memory for _sandwich_forward.3']
    %9 = vsyncpa [#allocation3], 0
    %s10 = scalar_lea.sflag [#allocation3], 1
    %11 = vsyncpa %s10, 0
    loop: start=0, step=1, limit=4
    $region2: #{_sandwich_forward.3} parent=1 // loop_pre_header
      _
    $region3: #{_sandwich_forward.3} parent=1 // loop_header
      %s13 = sphi 0, %s17
      %p14 = scmp.ge.s32.totalorder %s13, 4
      %s20 = sphi 0, %s32
      %s21 = sphi 0, %s28
      %s22 = sphi 0, %s20
      %s23 = sphi 0, %s21
      %s24 = sphi 0, %s22
      %s25 = sphi 0, %s23
      %s37 = sphi 0, %s39
      %s40 = sphi 0, %s37
      %s41 = sphi 0, %s40
      %s57 = sphi 0, %s41
      %s61 = sphi 0, %s61
      %s63 = sphi 0, %s61
      %s64 = sphi 0, %s63
      %s78 = sphi 0, %s64
      %s82 = sphi 0, %s82
      %s84 = sphi 0, %s82
      %s85 = sphi 0, %s84
      %s99 = sphi 0, %s85
      %s103 = sphi 0, %s103
      %s105 = sphi 0, %s103
      %s106 = sphi 0, %s105
      %s120 = sphi 0, %s106
      %s128 = sphi 0, %s130
      %s131 = sphi 0, %s128
      %s132 = sphi 0, %s131
      %s148 = sphi 0, %s132
    $region4: #{_sandwich_forward.3} parent=1 // loop_header_branch
      %16 = sbr.rel (%p14) target = $region8
    $region5: #{_sandwich_forward.3} parent=1 // loop_body
      %s18 = ssub.s32 %s13, 1
      %s19 = ssub.s32 %s13, 2
      %s26 = sadd.s32 1, %s21
      %p27 = scmp.ge.s32.totalorder %s26, 1
      %s28 = scalar_select %p27, 0, %s26
      %s29 = sadd.s32 1, %s20
      %s30 = scalar_select %p27, %s29, %s20
      %p31 = scmp.ge.s32.totalorder %s30, 2
      %s32 = scalar_select %p31, 0, %s30
      %s33 = ssub.s32 %s20, %s32
      %s34 = ssub.s32 %s21, %s28
      %s35 = sor.u32 %s33, %s34
      %p36 = scmp.eq.s32.totalorder %s35, 0
      %s38 = sadd.s32 %s37, 1
      %s39 = scalar_select %p36, %s37, %s38
      %p42 = pneg %p36
      %p43 = scmp.eq.s32.totalorder %s13, 1
      %p44 = por %p42, %p43
      %p45 = scmp.ne.s32.totalorder %s37, %s40
      %p46 = scmp.eq.s32.totalorder %s13, 0
      %p47 = por %p45, %p46
      %p48 = scmp.ne.s32.totalorder %s37, %s40
      %p49 = scmp.eq.s32.totalorder %s18, 1
      %p50 = por %p48, %p49
      %p51 = scmp.ne.s32.totalorder %s40, %s41
      %p52 = scmp.eq.s32.totalorder %s18, 0
      %p53 = por %p51, %p52
      %p54 = scmp.ne.s32.totalorder %s40, %s41
      %p55 = scmp.eq.s32.totalorder %s19, 1
      %p56 = por %p54, %p55
      %p58 = scmp.ne.s32.totalorder %s41, %s57
      %p59 = scmp.eq.s32.totalorder %s19, 0
      %p60 = por %p58, %p59
      %s62 = sadd.s32 %s61, 1
      %p65 = scmp.eq.s32.totalorder %s13, 1
      %p66 = scmp.ne.s32.totalorder %s61, %s63
      %p67 = scmp.eq.s32.totalorder %s13, 0
      %p68 = por %p66, %p67
      %p69 = scmp.ne.s32.totalorder %s61, %s63
      %p70 = scmp.eq.s32.totalorder %s18, 1
      %p71 = por %p69, %p70
      %p72 = scmp.ne.s32.totalorder %s63, %s64
      %p73 = scmp.eq.s32.totalorder %s18, 0
      %p74 = por %p72, %p73
      %p75 = scmp.ne.s32.totalorder %s63, %s64
      %p76 = scmp.eq.s32.totalorder %s19, 1
      %p77 = por %p75, %p76
      %p79 = scmp.ne.s32.totalorder %s64, %s78
      %p80 = scmp.eq.s32.totalorder %s19, 0
      %p81 = por %p79, %p80
      %s83 = sadd.s32 %s82, 1
      %p86 = scmp.eq.s32.totalorder %s13, 1
      %p87 = scmp.ne.s32.totalorder %s82, %s84
      %p88 = scmp.eq.s32.totalorder %s13, 0
      %p89 = por %p87, %p88
      %p90 = scmp.ne.s32.totalorder %s82, %s84
      %p91 = scmp.eq.s32.totalorder %s18, 1
      %p92 = por %p90, %p91
      %p93 = scmp.ne.s32.totalorder %s84, %s85
      %p94 = scmp.eq.s32.totalorder %s18, 0
      %p95 = por %p93, %p94
      %p96 = scmp.ne.s32.totalorder %s84, %s85
      %p97 = scmp.eq.s32.totalorder %s19, 1
      %p98 = por %p96, %p97
      %p100 = scmp.ne.s32.totalorder %s85, %s99
      %p101 = scmp.eq.s32.totalorder %s19, 0
      %p102 = por %p100, %p101
      %s104 = sadd.s32 %s103, 1
      %p107 = scmp.eq.s32.totalorder %s13, 1
      %p108 = scmp.ne.s32.totalorder %s103, %s105
      %p109 = scmp.eq.s32.totalorder %s13, 0
      %p110 = por %p108, %p109
      %p111 = scmp.ne.s32.totalorder %s103, %s105
      %p112 = scmp.eq.s32.totalorder %s18, 1
      %p113 = por %p111, %p112
      %p114 = scmp.ne.s32.totalorder %s105, %s106
      %p115 = scmp.eq.s32.totalorder %s18, 0
      %p116 = por %p114, %p115
      %p117 = scmp.ne.s32.totalorder %s105, %s106
      %p118 = scmp.eq.s32.totalorder %s19, 1
      %p119 = por %p117, %p118
      %p121 = scmp.ne.s32.totalorder %s106, %s120
      %p122 = scmp.eq.s32.totalorder %s19, 0
      %p123 = por %p121, %p122
      %s124 = ssub.s32 %s20, %s32
      %s125 = ssub.s32 %s21, %s28
      %s126 = sor.u32 %s124, %s125
      %p127 = scmp.eq.s32.totalorder %s126, 0
      %s129 = sadd.s32 %s128, 1
      %s130 = scalar_select %p127, %s128, %s129
      %p133 = pneg %p127
      %p134 = scmp.eq.s32.totalorder %s13, 1
      %p135 = por %p133, %p134
      %p136 = scmp.ne.s32.totalorder %s128, %s131
      %p137 = scmp.eq.s32.totalorder %s13, 0
      %p138 = por %p136, %p137
      %p139 = scmp.ne.s32.totalorder %s128, %s131
      %p140 = scmp.eq.s32.totalorder %s18, 1
      %p141 = por %p139, %p140
      %p142 = scmp.ne.s32.totalorder %s131, %s132
      %p143 = scmp.eq.s32.totalorder %s18, 0
      %p144 = por %p142, %p143
      %p145 = scmp.ne.s32.totalorder %s131, %s132
      %p146 = scmp.eq.s32.totalorder %s19, 1
      %p147 = por %p145, %p146
      %p149 = scmp.ne.s32.totalorder %s132, %s148
      %p150 = scmp.eq.s32.totalorder %s19, 0
      %p151 = por %p149, %p150
      %p152 = scmp.le.s32.totalorder 1, %s13
      %p153 = scmp.lt.s32.totalorder %s13, 3
      %p154 = pnand %p152, %p153
      %p155 = pneg %p154
      // Predicated region
      $region9: #{_sandwich_forward.3} parent=5 // pred_check
        _
      $region10: #{_sandwich_forward.3} parent=5 // pred_check_branch
        %157 = sbr.rel (%p154) target = $region12
      $region11: #{_sandwich_forward.3} parent=5 // pred_region
        %s158 = ssub.s32 %s13, 1
        // Predicated region
        $region13: #{_sandwich_forward.3} parent=11 // pred_check
          %p159 = pneg %p74
        $region14: #{_sandwich_forward.3} parent=11 // pred_check_branch
          %161 = sbr.rel (%p159) target = $region16
        $region15: #{_sandwich_forward.3} parent=11 // pred_region
          _
        $region16: #{_sandwich_forward.3} parent=11 // pred_fallthru
          _
        // Predicated region
        $region17: #{_sandwich_forward.3} parent=11 // pred_check
          %p162 = pneg %p95
        $region18: #{_sandwich_forward.3} parent=11 // pred_check_branch
          %164 = sbr.rel (%p162) target = $region20
        $region19: #{_sandwich_forward.3} parent=11 // pred_region
          _
        $region20: #{_sandwich_forward.3} parent=11 // pred_fallthru
          _
        // Predicated region
        $region21: #{_sandwich_forward.3} parent=11 // pred_check
          %p165 = pneg %p116
        $region22: #{_sandwich_forward.3} parent=11 // pred_check_branch
          %167 = sbr.rel (%p165) target = $region24
        $region23: #{_sandwich_forward.3} parent=11 // pred_region
          _
        $region24: #{_sandwich_forward.3} parent=11 // pred_fallthru
          _
      $region12: #{_sandwich_forward.3} parent=5 // pred_fallthru
        _
      %p168 = scmp.lt.s32.totalorder %s13, 2
      // Predicated region
      $region25: #{_sandwich_forward.3} parent=5 // pred_check
        %p169 = pneg %p168
      $region26: #{_sandwich_forward.3} parent=5 // pred_check_branch
        %171 = sbr.rel (%p169) target = $region28
      $region27: #{_sandwich_forward.3} parent=5 // pred_region
        // Predicated region
        $region29: #{_sandwich_forward.3} parent=27 // pred_check
          %p172 = pneg %p47
        $region30: #{_sandwich_forward.3} parent=27 // pred_check_branch
          %174 = sbr.rel (%p172) target = $region32
        $region31: #{_sandwich_forward.3} parent=27 // pred_region
          %p175 = scmp.lt.s32.totalorder %s20, 1
          %s176 = scalar_select %p175, %s20, 1
          %p177 = scmp.lt.s32.totalorder %s21, 0
          %s178 = scalar_select %p177, %s21, 0
          %s179 = smul.addr %s178, 2
          %s180 = smul.addr %s176, 2
          %s181 = sadd.s32 %s179, %s180
          %s182 = smul.addr %s181, 2
          %s183 = scalar_lea.vmem %s0, %s182
        $region32: #{_sandwich_forward.3} parent=27 // pred_fallthru
          _
      $region28: #{_sandwich_forward.3} parent=5 // pred_fallthru
        _
      %p184 = scmp.le.s32.totalorder 1, %s13
      %p185 = scmp.lt.s32.totalorder %s13, 3
      %p186 = pnand %p184, %p185
      %p187 = pneg %p186
      // Predicated region
      $region33: #{_sandwich_forward.3} parent=5 // pred_check
        _
      $region34: #{_sandwich_forward.3} parent=5 // pred_check_branch
        %189 = sbr.rel (%p186) target = $region36
      $region35: #{_sandwich_forward.3} parent=5 // pred_region
        %s190 = ssub.s32 %s13, 1
        %p191 = scmp.lt.s32.totalorder %s22, 1
        %s192 = scalar_select %p191, %s22, 1
        %p193 = scmp.lt.s32.totalorder %s23, 0
        %s194 = scalar_select %p193, %s23, 0
        %s195 = smul.addr %s194, 2
        %s196 = smul.addr %s192, 2
        %s197 = sadd.s32 %s195, %s196
        %s198 = smul.addr %s197, 2
        %s199 = scalar_lea.vmem %s0, %s198
        %p200 = pneg %p53
        %p201 = pneg %p50
        %p202 = pneg %p74
        %p203 = pneg %p71
        %p204 = pneg %p95
        %p205 = pneg %p92
        %p206 = pneg %p116
        %p207 = pneg %p113
        %p208 = pneg %p144
        %p209 = pneg %p141
        %s210 = sand.u32 %s131, 1
        %s211 = scalar_lea.sflag [#allocation3], %s210
        %s212 = sand.u32 %s131, 1
        %s213 = smul.addr %s212, 8
        %s214 = scalar_lea.vmem [#allocation2], %s213
        %p215 = scmp.lt.s32.totalorder %s22, 1
        %s216 = scalar_select %p215, %s22, 1
        %p217 = scmp.lt.s32.totalorder %s23, 0
        %s218 = scalar_select %p217, %s23, 0
        %s219 = smul.addr %s218, 2
        %s220 = smul.addr %s216, 2
        %s221 = sadd.s32 %s219, %s220
        %s222 = smul.addr %s221, 2
        %s223 = scalar_lea.vmem %s0, %s222
        %v225 = vld [vmem:[%s223] sm:$0xf]
        %v226 = vld [vmem:[%s1] sm:$0xf]
        %s227 = scalar_lea.vmem %s1, 4
        %v228 = vld [vmem:[%s227] sm:$0xf]
        %230 = vst [vmem:[#allocation1] ss:$4 sm:$0xff] %v225
        %v231 = vld.sshfl [vmem:[#allocation1] sm:$0xff pattern:$0x73625140]
        %v233 = vld.sshfl [vmem:[#allocation1 + $0x8] sm:$0xff pattern:$0x73625140]
        %235 = vrot.lane.b32.xlu0 %v231, 127
        %v236 = vpop.permute.xlu0 %235
        %237 = vrot.lane.b32.xlu0 %v233, 127
        %v238 = vpop.permute.xlu0 %237
        %vm239 = vcmask 1039360
        %v240 = vsel %vm239, %v236, %v238
        %vm241 = vcmask 31744
        %v243 = vsel %vm241, %v228, 0
        %vm245 = vcmask 1041408
        %v247 = vsel %vm245, %v240, 0
        %249 = vmatpush.bf16.msra.mxu0 0
        %250 = vmatpush.bf16.msra.mxu0 0
        %251 = vmatpush.bf16.msra.mxu0 0
        %252 = vmatpush.bf16.msra.mxu0 0
        %253 = vmatpush.bf16.msra.mxu0 0
        %254 = vmatpush.bf16.msra.mxu0 0
        %255 = vmatpush.bf16.msra.mxu0 0
        %256 = vmatpush.bf16.msra.mxu0 %v247
        %257 = vmatmul.bf16.gmra.mxu0 %v243
        %v258 = vpop.f32.mrf.mxu0
        %v259 = vadd.f32 0.0, %v258
        %v260 = vpop.f32.mrf.mxu0
        %261 = vdwg.mxu0
        %v263 = vsel %vm241, %v226, 0
        %v265 = vsel %vm245, %v225, 0
        %267 = vmatpush.bf16.msra.mxu0 0
        %268 = vmatpush.bf16.msra.mxu0 0
        %269 = vmatpush.bf16.msra.mxu0 0
        %270 = vmatpush.bf16.msra.mxu0 0
        %271 = vmatpush.bf16.msra.mxu0 0
        %272 = vmatpush.bf16.msra.mxu0 0
        %273 = vmatpush.bf16.msra.mxu0 0
        %274 = vmatpush.bf16.msra.mxu0 %v265
        %275 = vmatmul.bf16.gmra.mxu0 %v263
        %v276 = vpop.f32.mrf.mxu0
        %v277 = vadd.f32 %v259, %v276
        %v278 = vpop.f32.mrf.mxu0
        %279 = vdwg.mxu0
        %s280 = scalar_lea.vmem %s1, 8
        %v281 = vld [vmem:[%s280] sm:$0xf]
        %282 = vst [vmem:[#allocation1] ss:$4 sm:$0xff] %v225
        %v283 = vld.sshfl [vmem:[#allocation1] sm:$0xff pattern:$0x73625140]
        %v285 = vld.sshfl [vmem:[#allocation1 + $0x8] sm:$0xff pattern:$0x73625140]
        %287 = vrot.lane.b32.xlu0 %v283, 126
        %v288 = vpop.permute.xlu0 %287
        %289 = vrot.lane.b32.xlu0 %v285, 126
        %v290 = vpop.permute.xlu0 %289
        %vm291 = vcmask 1031168
        %v292 = vsel %vm291, %v288, %v290
        %v294 = vsel %vm241, %v281, 0
        %v297 = vsel %vm245, %v292, 0
        %299 = vmatpush.bf16.msra.mxu0 0
        %300 = vmatpush.bf16.msra.mxu0 0
        %301 = vmatpush.bf16.msra.mxu0 0
        %302 = vmatpush.bf16.msra.mxu0 0
        %303 = vmatpush.bf16.msra.mxu0 0
        %304 = vmatpush.bf16.msra.mxu0 0
        %305 = vmatpush.bf16.msra.mxu0 0
        %306 = vmatpush.bf16.msra.mxu0 %v297
        %307 = vmatmul.bf16.gmra.mxu0 %v294
        %v308 = vpop.f32.mrf.mxu0
        %v309 = vadd.f32 0.0, %v308
        %v310 = vpop.f32.mrf.mxu0
        %311 = vdwg.mxu0
        %v312 = vadd.f32 %v277, %v309
        %v313 = vld [vmem:[%s2] sm:$0xff]
        %315 = vset.pattern.permute.xlu0 0
        %316 = vperm.xlu0 %315, %v313
        %v317 = vpop.permute.xlu0 %316
        %v319 = vmul.f32 %v312, %v317
        %v320 = vld [vmem:[%s3] sm:$0xff]
        %322 = vset.pattern.permute.xlu0 0
        %323 = vperm.xlu0 %322, %v320
        %v324 = vpop.permute.xlu0 %323
        %v326 = vadd.f32 %v319, %v324
        %vm327 = vcmp.ge.f32.partialorder %v326, 0.0
        %v328 = vmul.f32 %v326, 0.2
        %v329 = vsel %vm327, %v326, %v328
        %330 = vst [vmem:[%s214] sm:$0xff] %v329
        %s331 = sand.u32 %s131, 1
        %s332 = scalar_lea.sflag [#allocation3], %s331
        %s333 = sand.u32 %s131, 1
        %s334 = smul.addr %s333, 8
        %s335 = scalar_lea.vmem [#allocation2], %s334
        // Predicated region
        $region37: #{_sandwich_forward.3} parent=35 // pred_check
          %p336 = pneg %p141
        $region38: #{_sandwich_forward.3} parent=35 // pred_check_branch
          %338 = sbr.rel (%p336) target = $region40
        $region39: #{_sandwich_forward.3} parent=35 // pred_region
          %340 = vsyncadd %s332, 0
          %s341 = sadd.s32 %s23, %s22
          %s342 = smul.addr %s341, 8
          %s343 = scalar_lea.hbm %s4, %s342
          %s345 = sshll.u32 %s335, 4
          %s346 = int_to_ptr.vmem [resolvable:$true] %s345
          %s347 = sshll.u32 %s343, 4
          %s348 = int_to_ptr.hbm [resolvable:$true] %s347
          %350 = dma.vmem_to_hbm [thread:$0]  %s346, 128, %s348, %s332
        $region40: #{_sandwich_forward.3} parent=35 // pred_fallthru
          _
      $region36: #{_sandwich_forward.3} parent=5 // pred_fallthru
        _
      %p351 = scmp.le.s32.totalorder 2, %s13
      // Predicated region
      $region41: #{_sandwich_forward.3} parent=5 // pred_check
        %p352 = pneg %p351
      $region42: #{_sandwich_forward.3} parent=5 // pred_check_branch
        %354 = sbr.rel (%p352) target = $region44
      $region43: #{_sandwich_forward.3} parent=5 // pred_region
        %s355 = ssub.s32 %s13, 2
        // Predicated region
        $region45: #{_sandwich_forward.3} parent=43 // pred_check
          %p356 = pneg %p147
        $region46: #{_sandwich_forward.3} parent=43 // pred_check_branch
          %358 = sbr.rel (%p356) target = $region48
        $region47: #{_sandwich_forward.3} parent=43 // pred_region
          %s359 = sand.u32 %s132, 1
          %s360 = scalar_lea.sflag [#allocation3], %s359
          %s361 = sand.u32 %s132, 1
          %s362 = smul.addr %s361, 8
          %s363 = scalar_lea.vmem [#allocation2], %s362
          %365 = dma.done %s360, 128
        $region48: #{_sandwich_forward.3} parent=43 // pred_fallthru
          _
      $region44: #{_sandwich_forward.3} parent=5 // pred_fallthru
        _
    $region6: #{_sandwich_forward.3} parent=1 // loop_footer
      %s17 = sadd.s32 1, %s13
    $region7: #{_sandwich_forward.3} parent=1 // loop_footer_branch
      %12 = sbr.rel target = $region3
    $region8: #{_sandwich_forward.3} parent=1 // loop_exit
      _
    %366 = vsyncpa [#allocation3], 1
    %s367 = scalar_lea.sflag [#allocation3], 1
    %368 = vsyncpa %s367, 1

</llo_original>
